<compile_context>
chip_gen: v7x
topology: tpu7x:2x2x1
jax: 0.10.0
libtpu: 0.0.40
codegen_flags: <defaults>
</compile_context>

<pallas_src>
import numpy as np
import jax
import jax.numpy as jnp
from jax.experimental import pallas as pl
from jax.experimental.pallas import tpu as pltpu

_TM_MAX = 1024                      # max tile rows (multiple of 8)
_LANE_CANDIDATES = (512, 256, 128)  # lane-dense last-dim candidates
_VMEM_LIMIT = 48 * 1024 * 1024      # safe on v5e/v6e and under v7x's 64 MiB


def haar_filters():
    """Rows: LL, LH, HL, HH; cols: taps (k00, k01, k10, k11). (Reference only.)"""
    L = (1.0 / np.sqrt(2.0)) * np.ones((1, 2))
    H = (1.0 / np.sqrt(2.0)) * np.ones((1, 2))
    H[0, 0] = -H[0, 0]
    LL = (np.transpose(L) * L).reshape(-1)
    LH = (np.transpose(L) * H).reshape(-1)
    HL = (np.transpose(H) * L).reshape(-1)
    HH = (np.transpose(H) * H).reshape(-1)
    return jnp.asarray(np.stack([LL, LH, HL, HH]), dtype=jnp.float32)  # (4, 4)


def _round_up(a, b):
    return -(-a // b) * b


def _wavepool_kernel(x_ref, ll_ref, lh_ref, hl_ref, hh_ref):
    # x_ref: (4, tm, L) in VMEM -- window taps (x00, x01, x10, x11) in a
    # flattened, lane-dense elementwise layout.  Compute in f32 in-register.
    f32 = jnp.float32
    x00 = x_ref[0].astype(f32)
    x01 = x_ref[1].astype(f32)
    x10 = x_ref[2].astype(f32)
    x11 = x_ref[3].astype(f32)
    # Haar butterfly; identical to the module's frozen depthwise filters
    #   L = [1/sqrt2, 1/sqrt2], H = [-1/sqrt2, 1/sqrt2] (outer products = +-0.5).
    s0 = x00 + x01
    d0 = x01 - x00
    s1 = x10 + x11
    d1 = x11 - x10
    dt = ll_ref.dtype
    ll_ref[...] = (0.5 * (s0 + s1)).astype(dt)
    lh_ref[...] = (0.5 * (d0 + d1)).astype(dt)
    hl_ref[...] = (0.5 * (s1 - s0)).astype(dt)
    hh_ref[...] = (0.5 * (d1 - d0)).astype(dt)


@jax.jit
def wavepool_two(x):
    """x: (N, C, H, W). Returns (LL, LH, HL, HH), each (N, C, H//2, W//2)."""
    N, C, H, W = x.shape
    assert H % 2 == 0 and W % 2 == 0, "H and W must be even (stride-2, no pad)"
    Hh, Wh = H // 2, W // 2
    total = N * C * Hh * Wh

    # Do not force-upcast bf16 (bandwidth-bound kernel); anything else -> f32.
    if x.dtype not in (jnp.float32, jnp.bfloat16):
        x = x.astype(jnp.float32)
    out_dtype = x.dtype

    # --- Layout glue only (no arithmetic): deinterleave the 2x2 windows.
    # Planes ordered (x00, x01, x10, x11); per-plane element order is row-major
    # (N, C, Hh, Wh), so the flat elementwise kernel + final reshape is exact.
    # Fed directly into pallas_call (allow_input_fusion) to avoid an HBM
    # round-trip when XLA can absorb it into the input.
    xr = x.reshape(N * C, Hh, 2, Wh, 2)
    xr = jnp.transpose(xr, (2, 4, 0, 1, 3)).reshape(4, total)

    # Pick a lane width that divides `total` (no pad op, back() is a free
    # reshape); otherwise pad to a multiple of 128 and trim afterwards.
    L = None
    for cand in _LANE_CANDIDATES:
        if total % cand == 0:
            L = cand
            break
    if L is None:
        L = 128
        padded = _round_up(total, L)
        xr = jnp.pad(xr, ((0, 0), (0, padded - total)))
    else:
        padded = total
    R = padded // L
    xr = xr.reshape(4, R, L)

    # Tile rows: multiple of 8 (ragged last block is masked by Pallas).  Force
    # >= 2 grid steps when possible so ("parallel",) can use both v7x cores.
    if R <= 8:
        tm = R                                   # single block == full dim
    else:
        tm = min(_TM_MAX, _round_up(pl.cdiv(R, 2), 8))
    grid = (pl.cdiv(R, tm),)

    in_bytes = 4 * R * L * jnp.dtype(x.dtype).itemsize
    out_bytes = 4 * R * L * jnp.dtype(out_dtype).itemsize
    cost = pl.CostEstimate(flops=12 * R * L, transcendentals=0,
                           bytes_accessed=in_bytes + out_bytes)

    out_spec = pl.BlockSpec((tm, L), lambda i: (i, 0))
    out_shape = tuple(jax.ShapeDtypeStruct((R, L), out_dtype) for _ in range(4))

    ll, lh, hl, hh = pl.pallas_call(
        _wavepool_kernel,
        grid=grid,
        in_specs=[pl.BlockSpec((4, tm, L), lambda i: (0, i, 0))],
        out_specs=(out_spec, out_spec, out_spec, out_spec),
        out_shape=out_shape,
        compiler_params=pltpu.CompilerParams(
            dimension_semantics=("parallel",),   # megacore-shard the 1-D grid
            vmem_limit_bytes=_VMEM_LIMIT,
            allow_input_fusion=[True],           # best-effort: fuse layout glue
        ),
        cost_estimate=cost,
    )(xr)

    def back(y):
        y = y.reshape(-1)
        if padded != total:
            y = y[:total]
        return y.reshape(N, C, Hh, Wh)

    return back(ll), back(lh), back(hl), back(hh)


def _reference(x, w):
    """Pure-JAX reference for the PyTorch depthwise 2x2/stride-2 convs."""
    x = x.astype(jnp.float32)
    x00 = x[:, :, 0::2, 0::2]
    x01 = x[:, :, 0::2, 1::2]
    x10 = x[:, :, 1::2, 0::2]
    x11 = x[:, :, 1::2, 1::2]
    return tuple(w[r, 0] * x00 + w[r, 1] * x01 + w[r, 2] * x10 + w[r, 3] * x11
                 for r in range(4))


if __name__ == "__main__":
    key = jax.random.PRNGKey(0)
    w = haar_filters()
    names = ("LL", "LH", "HL", "HH")

    # Small module-consistent test, plus shapes exercising the multi-block
    # path (grid > 1) and the lane-pad + ragged-last-block fallback path.
    for shape in ((2, 4, 16, 16),    # total=512   -> L=512, R=1, grid=1
                  (2, 8, 64, 64),    # total=16384 -> L=512, R=32, grid=2
                  (2, 4, 40, 36)):   # total=2880  -> pad to 128, ragged block
        key, sub = jax.random.split(key)
        x = jax.random.normal(sub, shape, dtype=jnp.float32)

        outs = jax.block_until_ready(wavepool_two(x))
        refs = _reference(x, w)

        N, C, H, W = shape
        for name, o, r in zip(names, outs, refs):
            assert o.shape == (N, C, H // 2, W // 2), (name, o.shape)
            assert o.dtype == jnp.float32
            np.testing.assert_allclose(np.asarray(o), np.asarray(r),
                                       rtol=1e-5, atol=1e-5)

    print("KERNEL_OK")
</pallas_src>

<mosaic_0001>
module attributes {stable_mosaic.version = 11 : i64} {
  func.func @_wavepool_kernel(%arg0: i32, %arg1: memref<4x1x512xf32, #tpu.memory_space<vmem>>, %arg2: memref<1x512xf32, #tpu.memory_space<vmem>>, %arg3: memref<1x512xf32, #tpu.memory_space<vmem>>, %arg4: memref<1x512xf32, #tpu.memory_space<vmem>>, %arg5: memref<1x512xf32, #tpu.memory_space<vmem>>) attributes {dimension_semantics = [#tpu.dimension_semantics<parallel>], iteration_bounds = array<i64: 1>, scalar_prefetch = 0 : i64, scratch_operands = 0 : i64, tpu.core_type = #tpu.core_type<tc>, window_params = [{transform_indices = @transform_0, window_bounds = array<i64: 4, 1, 512>}, {transform_indices = @transform_1, window_bounds = array<i64: 1, 512>}, {transform_indices = @transform_2, window_bounds = array<i64: 1, 512>}, {transform_indices = @transform_3, window_bounds = array<i64: 1, 512>}, {transform_indices = @transform_4, window_bounds = array<i64: 1, 512>}]} {
    %c0 = arith.constant 0 : index
    %c0_0 = arith.constant 0 : index
    %c0_1 = arith.constant 0 : index
    %0 = vector.load %arg1[%c0, %c0_0, %c0_1] : memref<4x1x512xf32, #tpu.memory_space<vmem>>, vector<1x1x512xf32>
    %1 = vector.shape_cast %0 : vector<1x1x512xf32> to vector<1x512xf32>
    %c1 = arith.constant 1 : index
    %c0_2 = arith.constant 0 : index
    %c0_3 = arith.constant 0 : index
    %2 = vector.load %arg1[%c1, %c0_2, %c0_3] : memref<4x1x512xf32, #tpu.memory_space<vmem>>, vector<1x1x512xf32>
    %3 = vector.shape_cast %2 : vector<1x1x512xf32> to vector<1x512xf32>
    %c2 = arith.constant 2 : index
    %c0_4 = arith.constant 0 : index
    %c0_5 = arith.constant 0 : index
    %4 = vector.load %arg1[%c2, %c0_4, %c0_5] : memref<4x1x512xf32, #tpu.memory_space<vmem>>, vector<1x1x512xf32>
    %5 = vector.shape_cast %4 : vector<1x1x512xf32> to vector<1x512xf32>
    %c3 = arith.constant 3 : index
    %c0_6 = arith.constant 0 : index
    %c0_7 = arith.constant 0 : index
    %6 = vector.load %arg1[%c3, %c0_6, %c0_7] : memref<4x1x512xf32, #tpu.memory_space<vmem>>, vector<1x1x512xf32>
    %7 = vector.shape_cast %6 : vector<1x1x512xf32> to vector<1x512xf32>
    %8 = arith.addf %1, %3 : vector<1x512xf32>
    %9 = arith.subf %3, %1 : vector<1x512xf32>
    %10 = arith.addf %5, %7 : vector<1x512xf32>
    %11 = arith.subf %7, %5 : vector<1x512xf32>
    %12 = arith.addf %8, %10 : vector<1x512xf32>
    %cst = arith.constant 5.000000e-01 : f32
    %13 = vector.broadcast %cst : f32 to vector<1x512xf32>
    %14 = arith.mulf %13, %12 : vector<1x512xf32>
    %c0_8 = arith.constant 0 : index
    %c0_9 = arith.constant 0 : index
    %15 = vector.load %arg2[%c0_8, %c0_9] : memref<1x512xf32, #tpu.memory_space<vmem>>, vector<1x512xf32>
    tpu.vector_store %arg2[%c0_8, %c0_9], %14 {strides = array<i32>} : memref<1x512xf32, #tpu.memory_space<vmem>>, vector<1x512xf32>,
    %16 = arith.addf %9, %11 : vector<1x512xf32>
    %cst_10 = arith.constant 5.000000e-01 : f32
    %17 = vector.broadcast %cst_10 : f32 to vector<1x512xf32>
    %18 = arith.mulf %17, %16 : vector<1x512xf32>
    %c0_11 = arith.constant 0 : index
    %c0_12 = arith.constant 0 : index
    %19 = vector.load %arg3[%c0_11, %c0_12] : memref<1x512xf32, #tpu.memory_space<vmem>>, vector<1x512xf32>
    tpu.vector_store %arg3[%c0_11, %c0_12], %18 {strides = array<i32>} : memref<1x512xf32, #tpu.memory_space<vmem>>, vector<1x512xf32>,
    %20 = arith.subf %10, %8 : vector<1x512xf32>
    %cst_13 = arith.constant 5.000000e-01 : f32
    %21 = vector.broadcast %cst_13 : f32 to vector<1x512xf32>
    %22 = arith.mulf %21, %20 : vector<1x512xf32>
    %c0_14 = arith.constant 0 : index
    %c0_15 = arith.constant 0 : index
    %23 = vector.load %arg4[%c0_14, %c0_15] : memref<1x512xf32, #tpu.memory_space<vmem>>, vector<1x512xf32>
    tpu.vector_store %arg4[%c0_14, %c0_15], %22 {strides = array<i32>} : memref<1x512xf32, #tpu.memory_space<vmem>>, vector<1x512xf32>,
    %24 = arith.subf %11, %9 : vector<1x512xf32>
    %cst_16 = arith.constant 5.000000e-01 : f32
    %25 = vector.broadcast %cst_16 : f32 to vector<1x512xf32>
    %26 = arith.mulf %25, %24 : vector<1x512xf32>
    %c0_17 = arith.constant 0 : index
    %c0_18 = arith.constant 0 : index
    %27 = vector.load %arg5[%c0_17, %c0_18] : memref<1x512xf32, #tpu.memory_space<vmem>>, vector<1x512xf32>
    tpu.vector_store %arg5[%c0_17, %c0_18], %26 {strides = array<i32>} : memref<1x512xf32, #tpu.memory_space<vmem>>, vector<1x512xf32>,
    return
  }
  func.func @transform_0(%arg0: i32) -> (i32, i32, i32) {
    %c0_i32 = arith.constant 0 : i32
    %c0_i32_0 = arith.constant 0 : i32
    %c0_i32_1 = arith.constant 0 : i32
    return %c0_i32, %arg0, %c0_i32_0 : i32, i32, i32
  }
  func.func @transform_1(%arg0: i32) -> (i32, i32) {
    %c0_i32 = arith.constant 0 : i32
    %c0_i32_0 = arith.constant 0 : i32
    return %arg0, %c0_i32 : i32, i32
  }
  func.func @transform_2(%arg0: i32) -> (i32, i32) {
    %c0_i32 = arith.constant 0 : i32
    %c0_i32_0 = arith.constant 0 : i32
    return %arg0, %c0_i32 : i32, i32
  }
  func.func @transform_3(%arg0: i32) -> (i32, i32) {
    %c0_i32 = arith.constant 0 : i32
    %c0_i32_0 = arith.constant 0 : i32
    return %arg0, %c0_i32 : i32, i32
  }
  func.func @transform_4(%arg0: i32) -> (i32, i32) {
    %c0_i32 = arith.constant 0 : i32
    %c0_i32_0 = arith.constant 0 : i32
    return %arg0, %c0_i32 : i32, i32
  }
}

</mosaic_0001>

<llo_original>
// kernel: wavepool_two.1
$region0: #{wavepool_two.1}
  #allocation0 [shape = 'u32[]', space=smem, size = 0x4, offset = 0x4, fixed_abs, tag = 'smem constant byte address 0x4 - core index']
  #allocation1 [shape = 'u32[144,128]{1,0:T(1,128)}', space=vmem, size = 0x12000, scoped, tag = 'internal scratch']
  %s0 = inlined_call_operand.vmem [shape: f32[4,1,512], index: 0, kind: input, shape index: {}]
  %s1 = inlined_call_operand.vmem [shape: f32[1,512], index: 1, kind: output, shape index: {0}]
  %s2 = inlined_call_operand.vmem [shape: f32[1,512], index: 2, kind: output, shape index: {1}]
  %s3 = inlined_call_operand.vmem [shape: f32[1,512], index: 3, kind: output, shape index: {2}]
  %s4 = inlined_call_operand.vmem [shape: f32[1,512], index: 4, kind: output, shape index: {3}]
  %5 = xla_tuple %s1, %s2, %s3, %s4
  %s6 = sld [smem:[#allocation0]]
  $region38: #{wavepool_two.1} parent=0
    _
  %s8 = ssub.s32 1, %s6
  %s9 = scalar_select 0, %s8, %s6
  // Predicated region
  $region2: #{wavepool_two.1} parent=0 // pred_check
    _
  $region3: #{wavepool_two.1} parent=0 // pred_check_branch
    %11 = sbr.rel (0) target = $region5
  $region4: #{wavepool_two.1} parent=0 // pred_region
    _
  $region5: #{wavepool_two.1} parent=0 // pred_fallthru
    _
  %v12 = vld [vmem:[%s0] sm:$0xf]
  %s13 = scalar_lea.vmem %s0, 4
  %v14 = vld [vmem:[%s13] sm:$0xf]
  %s15 = scalar_lea.vmem %s0, 8
  %v16 = vld [vmem:[%s15] sm:$0xf]
  %s17 = scalar_lea.vmem %s0, 12
  %v18 = vld [vmem:[%s17] sm:$0xf]
  %v19 = vadd.f32 %v12, %v14
  %v20 = vsub.f32 %v14, %v12
  %v21 = vadd.f32 %v16, %v18
  %v22 = vsub.f32 %v18, %v16
  %v23 = vadd.f32 %v19, %v21
  %v24 = vmul.f32 %v23, 0.5
  %v25 = vlaneseq
  %vm26 = vcmp.ge.s32.totalorder %v25, 0
  %vm27 = vcmp.lt.s32.totalorder %v25, 512
  %vm28 = vmand %vm26, %vm27
  %29 = vst.msk [vmem:[%s1] sm:$0xf] %vm28, %v24
  %v30 = vadd.f32 %v20, %v22
  %v31 = vmul.f32 %v30, 0.5
  %32 = vst.msk [vmem:[%s2] sm:$0xf] %vm28, %v31
  %v33 = vsub.f32 %v21, %v19
  %v34 = vmul.f32 %v33, 0.5
  %35 = vst.msk [vmem:[%s3] sm:$0xf] %vm28, %v34
  %v36 = vsub.f32 %v22, %v20
  %v37 = vmul.f32 %v36, 0.5
  %38 = vst.msk [vmem:[%s4] sm:$0xf] %vm28, %v37
  // Predicated region
  $region6: #{wavepool_two.1} parent=0 // pred_check
    _
  $region7: #{wavepool_two.1} parent=0 // pred_check_branch
    %40 = sbr.rel (0) target = $region9
  $region8: #{wavepool_two.1} parent=0 // pred_region
    _
  $region9: #{wavepool_two.1} parent=0 // pred_fallthru
    _
  // Predicated region
  $region10: #{wavepool_two.1} parent=0 // pred_check
    _
  $region11: #{wavepool_two.1} parent=0 // pred_check_branch
    %42 = sbr.rel (0) target = $region13
  $region12: #{wavepool_two.1} parent=0 // pred_region
    _
  $region13: #{wavepool_two.1} parent=0 // pred_fallthru
    _
  // Predicated region
  $region14: #{wavepool_two.1} parent=0 // pred_check
    _
  $region15: #{wavepool_two.1} parent=0 // pred_check_branch
    %44 = sbr.rel (0) target = $region17
  $region16: #{wavepool_two.1} parent=0 // pred_region
    _
  $region17: #{wavepool_two.1} parent=0 // pred_fallthru
    _
  // Predicated region
  $region18: #{wavepool_two.1} parent=0 // pred_check
    _
  $region19: #{wavepool_two.1} parent=0 // pred_check_branch
    %46 = sbr.rel (0) target = $region21
  $region20: #{wavepool_two.1} parent=0 // pred_region
    _
  $region21: #{wavepool_two.1} parent=0 // pred_fallthru
    _
  // Predicated region
  $region22: #{wavepool_two.1} parent=0 // pred_check
    _
  $region23: #{wavepool_two.1} parent=0 // pred_check_branch
    %48 = sbr.rel (0) target = $region25
  $region24: #{wavepool_two.1} parent=0 // pred_region
    _
  $region25: #{wavepool_two.1} parent=0 // pred_fallthru
    _
  // Predicated region
  $region26: #{wavepool_two.1} parent=0 // pred_check
    _
  $region27: #{wavepool_two.1} parent=0 // pred_check_branch
    %50 = sbr.rel (0) target = $region29
  $region28: #{wavepool_two.1} parent=0 // pred_region
    _
  $region29: #{wavepool_two.1} parent=0 // pred_fallthru
    _
  // Predicated region
  $region30: #{wavepool_two.1} parent=0 // pred_check
    _
  $region31: #{wavepool_two.1} parent=0 // pred_check_branch
    %52 = sbr.rel (0) target = $region33
  $region32: #{wavepool_two.1} parent=0 // pred_region
    _
  $region33: #{wavepool_two.1} parent=0 // pred_fallthru
    _
  // Predicated region
  $region34: #{wavepool_two.1} parent=0 // pred_check
    _
  $region35: #{wavepool_two.1} parent=0 // pred_check_branch
    %54 = sbr.rel (0) target = $region37
  $region36: #{wavepool_two.1} parent=0 // pred_region
    _
  $region37: #{wavepool_two.1} parent=0 // pred_fallthru
    _

</llo_original>
